<compile_context>
chip_gen: v7x
topology: tpu7x:2x2x1
jax: 0.10.0
libtpu: 0.0.40
codegen_flags: <defaults>
</compile_context>

<pallas_src>
import functools

import jax
import jax.numpy as jnp
from jax.experimental import pallas as pl
from jax.experimental.pallas import tpu as pltpu


def _dwconv_kernel(x_ref, w_ref, b_ref, m_ref, o_ref, *, img_w):
    """One (row_tile, L) slab of depthwise 3x3 conv (stride=1, pad=1).

    Rows = flattened batch*channel; lanes = flattened (128-padded) H*W axis.
    Edge handling uses resident precomputed 0/1 masks instead of per-step
    iota / modulo / compares.
    """
    lanes = x_ref.shape[-1]
    x = x_ref[...]                        # (rt, L)  compute dtype (f32 or bf16)
    wt = w_ref[...]                       # (rt, 9)  compute dtype, row-major 3x3
    m = m_ref[...]                        # (8, L)   compute dtype 0/1 masks
    m_left, m_right = m[0:1], m[1:2]
    m_up, m_down = m[2:3], m[3:4]

    # Column-shifted views (XLU rolls).  Lane/row wrap artifacts are removed by
    # the resident column masks.  Positive static shifts only (roll by L-1 ==
    # roll by -1; lowers to a per-vreg rotate + merge, same cost class as 1).
    x_lft = pltpu.roll(x, shift=1, axis=1) * m_left             # source col-1
    x_rgt = pltpu.roll(x, shift=lanes - 1, axis=1) * m_right    # source col+1

    def row_taps(dh):
        # 3-tap horizontal sum of kernel row `dh`, evaluated at the source row.
        return (wt[:, 3 * dh + 0:3 * dh + 1] * x_lft
                + wt[:, 3 * dh + 1:3 * dh + 2] * x
                + wt[:, 3 * dh + 2:3 * dh + 3] * x_rgt)

    p_up, p_mid, p_dn = row_taps(0), row_taps(1), row_taps(2)

    # The +/-W row shifts are applied to the row partials; the three partials
    # and the bias accumulate in f32 (exact enough for 9 taps, bf16-safe).
    acc = (p_mid.astype(jnp.float32)
           + (pltpu.roll(p_up, shift=img_w % lanes, axis=1)
              * m_up).astype(jnp.float32)
           + (pltpu.roll(p_dn, shift=(lanes - img_w) % lanes, axis=1)
              * m_down).astype(jnp.float32)
           + b_ref[...])                  # (rt, 1) f32 bias, lane-broadcast
    o_ref[...] = acc.astype(o_ref.dtype)


def _vmem_budget_bytes():
    """VMEM limit: headroom on 64 MiB parts (v7x), more on 128 MiB (v5e/v6e)."""
    default = 48 * 1024 * 1024
    try:
        cap = int(pltpu.get_tpu_info().vmem_capacity_bytes)
        if cap > 0:
            return min(cap * 3 // 4, 112 * 1024 * 1024)
    except Exception:
        pass
    return default


def _pick_row_tile(rows, lanes, itemsize, vmem_budget, max_tile=512):
    """Largest dtype-aligned divisor of `rows` whose working set fits VMEM."""
    align = {1: 32, 2: 16}.get(itemsize, 8)     # int8 / bf16 / f32 sublane packing
    # Per row: double-buffered in+out blocks plus ~7 full-width f32 temporaries.
    per_row = lanes * (4 * itemsize + 7 * 4)
    cap = max(1, min(rows, max_tile, int((vmem_budget // 2) // per_row)))
    divisors = [t for t in range(1, cap + 1) if rows % t == 0]
    aligned = [t for t in divisors if t % align == 0]
    if aligned:
        return max(aligned)
    # TODO(synk): for huge H*W with no aligned row divisor, tile the spatial
    # axis with a +/-W halo instead of falling back to a full-extent block.
    return rows


def dwconv(x, weight, bias, *, row_tile=None):
    """DWConv forward: Conv2d(dim, dim, 3, 1, 1, bias=True, groups=dim).

    x: (B, C, H, W); weight: (C, 1, 3, 3); bias: (C,).  Returns (B, C, H, W).
    """
    b, c, h, w = x.shape
    hw = h * w
    lanes = max(128, ((hw + 127) // 128) * 128)   # lane-dense, unmasked stores
    rows = b * c

    # bf16 tap math on bf16 inputs (bf16 VALU on v6e/v7x), f32 otherwise.
    # NOTE: on v5e (no bf16 VALU) an f32 upcast of bf16 inputs may be preferable.
    compute_dtype = jnp.bfloat16 if x.dtype == jnp.bfloat16 else jnp.float32

    # Free reshape to (B*C, H*W); pad lanes to a 128-multiple only if needed.
    x2 = x.reshape(rows, hw)
    if x2.dtype != compute_dtype:
        x2 = x2.astype(compute_dtype)
    if lanes != hw:
        x2 = jnp.pad(x2, ((0, 0), (0, lanes - hw)))

    # Tiny per-row parameters tiled over batch (few KB) so the grid is a single
    # flat row axis; taps in compute dtype, bias in f32 (f32 accumulation).
    w2 = jnp.broadcast_to(weight.reshape(1, c, 9).astype(compute_dtype),
                          (b, c, 9)).reshape(rows, 9)
    b2 = jnp.broadcast_to(bias.reshape(1, c, 1).astype(jnp.float32),
                          (b, c, 1)).reshape(rows, 1)

    # Precomputed edge-validity masks; resident in VMEM (constant index_map).
    li = jnp.arange(lanes, dtype=jnp.int32)
    col = li % w
    masks = jnp.stack([
        col != 0,                          # left-neighbour valid
        col != w - 1,                      # right-neighbour valid
        (li >= w) & (li < hw),             # row-above valid (and lane < H*W)
        (li + w) < hw,                     # row-below valid
    ]).astype(compute_dtype)
    masks = jnp.pad(masks, ((0, 4), (0, 0)))        # pad sublanes 4 -> 8

    vmem_budget = _vmem_budget_bytes()
    rt = row_tile if row_tile is not None else _pick_row_tile(
        rows, lanes, jnp.dtype(compute_dtype).itemsize, vmem_budget)
    if rows % rt != 0:
        raise ValueError(f"row tile {rt} must divide B*C={rows}")

    kernel = functools.partial(_dwconv_kernel, img_w=w)

    out = pl.pallas_call(
        kernel,
        out_shape=jax.ShapeDtypeStruct((rows, lanes), x.dtype),
        grid_spec=pltpu.PrefetchScalarGridSpec(
            num_scalar_prefetch=0,
            grid=(rows // rt,),
            in_specs=[
                pl.BlockSpec((rt, lanes), lambda i: (i, 0)),
                pl.BlockSpec((rt, 9), lambda i: (i, 0)),
                pl.BlockSpec((rt, 1), lambda i: (i, 0)),
                pl.BlockSpec((8, lanes), lambda i: (0, 0)),   # resident masks
            ],
            out_specs=pl.BlockSpec((rt, lanes), lambda i: (i, 0)),
        ),
        compiler_params=pltpu.CompilerParams(
            dimension_semantics=("parallel",),
            vmem_limit_bytes=vmem_budget,
        ),
    )(x2, w2, b2, masks)

    if lanes != hw:
        out = out[:, :hw]
    return out.reshape(b, c, h, w)


if __name__ == "__main__":
    batch, dim, height, width = 2, 32, 16, 16

    key = jax.random.PRNGKey(0)
    kx, kw, kb = jax.random.split(key, 3)
    x = jax.random.normal(kx, (batch, dim, height, width), jnp.float32)
    weight = jax.random.normal(kw, (dim, 1, 3, 3), jnp.float32) / 3.0
    bias = jax.random.normal(kb, (dim,), jnp.float32) * 0.1

    out = dwconv(x, weight, bias, row_tile=16)   # exercise >1 grid step
    jax.block_until_ready(out)
    assert out.shape == (batch, dim, height, width)
    assert bool(jnp.all(jnp.isfinite(out)))

    # Reference: XLA grouped (depthwise) conv + bias.
    ref = jax.lax.conv_general_dilated(
        x, weight, window_strides=(1, 1), padding=((1, 1), (1, 1)),
        dimension_numbers=("NCHW", "OIHW", "NCHW"),
        feature_group_count=dim,
        precision=jax.lax.Precision.HIGHEST,
    ) + bias.reshape(1, dim, 1, 1)
    assert bool(jnp.allclose(out, ref, atol=1e-4, rtol=1e-4)), (
        float(jnp.max(jnp.abs(out - ref))))

    # Also check the auto-picked (single large block) tiling path.
    out2 = dwconv(x, weight, bias)
    jax.block_until_ready(out2)
    assert bool(jnp.allclose(out2, ref, atol=1e-4, rtol=1e-4))

    print("KERNEL_OK")
</pallas_src>

<mosaic_0001>
module attributes {stable_mosaic.version = 11 : i64} {
  func.func @_dwconv_kernel(%arg0: i32, %arg1: memref<16x256xf32, #tpu.memory_space<vmem>>, %arg2: memref<16x9xf32, #tpu.memory_space<vmem>>, %arg3: memref<16x1xf32, #tpu.memory_space<vmem>>, %arg4: memref<8x256xf32, #tpu.memory_space<vmem>>, %arg5: memref<16x256xf32, #tpu.memory_space<vmem>>) attributes {dimension_semantics = [#tpu.dimension_semantics<parallel>], iteration_bounds = array<i64: 4>, scalar_prefetch = 0 : i64, scratch_operands = 0 : i64, tpu.core_type = #tpu.core_type<tc>, window_params = [{transform_indices = @transform_0, window_bounds = array<i64: 16, 256>}, {transform_indices = @transform_1, window_bounds = array<i64: 16, 9>}, {transform_indices = @transform_2, window_bounds = array<i64: 16, 1>}, {pipeline_mode = #tpu.pipeline_mode<synchronous>, transform_indices = @transform_3, window_bounds = array<i64: 8, 256>}, {transform_indices = @transform_4, window_bounds = array<i64: 16, 256>}]} {
    %c0 = arith.constant 0 : index
    %c0_0 = arith.constant 0 : index
    %0 = vector.load %arg1[%c0, %c0_0] : memref<16x256xf32, #tpu.memory_space<vmem>>, vector<16x256xf32>
    %c0_1 = arith.constant 0 : index
    %c0_2 = arith.constant 0 : index
    %1 = vector.load %arg2[%c0_1, %c0_2] : memref<16x9xf32, #tpu.memory_space<vmem>>, vector<16x9xf32>
    %c0_3 = arith.constant 0 : index
    %c0_4 = arith.constant 0 : index
    %2 = vector.load %arg4[%c0_3, %c0_4] : memref<8x256xf32, #tpu.memory_space<vmem>>, vector<8x256xf32>
    %3 = vector.extract_strided_slice %2 {offsets = [0, 0], sizes = [1, 256], strides = [1, 1]} : vector<8x256xf32> to vector<1x256xf32>
    %4 = vector.extract_strided_slice %2 {offsets = [1, 0], sizes = [1, 256], strides = [1, 1]} : vector<8x256xf32> to vector<1x256xf32>
    %5 = vector.extract_strided_slice %2 {offsets = [2, 0], sizes = [1, 256], strides = [1, 1]} : vector<8x256xf32> to vector<1x256xf32>
    %6 = vector.extract_strided_slice %2 {offsets = [3, 0], sizes = [1, 256], strides = [1, 1]} : vector<8x256xf32> to vector<1x256xf32>
    %c1_i32 = arith.constant 1 : i32
    %7 = tpu.dynamic_rotate %0 by %c1_i32 dim 1 : vector<16x256xf32>, i32 -> vector<16x256xf32>
    %8 = vector.broadcast %3 : vector<1x256xf32> to vector<16x256xf32>
    %9 = arith.mulf %7, %8 : vector<16x256xf32>
    %c255_i32 = arith.constant 255 : i32
    %10 = tpu.dynamic_rotate %0 by %c255_i32 dim 1 : vector<16x256xf32>, i32 -> vector<16x256xf32>
    %11 = vector.broadcast %4 : vector<1x256xf32> to vector<16x256xf32>
    %12 = arith.mulf %10, %11 : vector<16x256xf32>
    %13 = vector.extract_strided_slice %1 {offsets = [0, 0], sizes = [16, 1], strides = [1, 1]} : vector<16x9xf32> to vector<16x1xf32>
    %14 = vector.broadcast %13 : vector<16x1xf32> to vector<16x256xf32>
    %15 = arith.mulf %14, %9 : vector<16x256xf32>
    %16 = vector.extract_strided_slice %1 {offsets = [0, 1], sizes = [16, 1], strides = [1, 1]} : vector<16x9xf32> to vector<16x1xf32>
    %17 = vector.broadcast %16 : vector<16x1xf32> to vector<16x256xf32>
    %18 = arith.mulf %17, %0 : vector<16x256xf32>
    %19 = arith.addf %15, %18 : vector<16x256xf32>
    %20 = vector.extract_strided_slice %1 {offsets = [0, 2], sizes = [16, 1], strides = [1, 1]} : vector<16x9xf32> to vector<16x1xf32>
    %21 = vector.broadcast %20 : vector<16x1xf32> to vector<16x256xf32>
    %22 = arith.mulf %21, %12 : vector<16x256xf32>
    %23 = arith.addf %19, %22 : vector<16x256xf32>
    %24 = vector.extract_strided_slice %1 {offsets = [0, 3], sizes = [16, 1], strides = [1, 1]} : vector<16x9xf32> to vector<16x1xf32>
    %25 = vector.broadcast %24 : vector<16x1xf32> to vector<16x256xf32>
    %26 = arith.mulf %25, %9 : vector<16x256xf32>
    %27 = vector.extract_strided_slice %1 {offsets = [0, 4], sizes = [16, 1], strides = [1, 1]} : vector<16x9xf32> to vector<16x1xf32>
    %28 = vector.broadcast %27 : vector<16x1xf32> to vector<16x256xf32>
    %29 = arith.mulf %28, %0 : vector<16x256xf32>
    %30 = arith.addf %26, %29 : vector<16x256xf32>
    %31 = vector.extract_strided_slice %1 {offsets = [0, 5], sizes = [16, 1], strides = [1, 1]} : vector<16x9xf32> to vector<16x1xf32>
    %32 = vector.broadcast %31 : vector<16x1xf32> to vector<16x256xf32>
    %33 = arith.mulf %32, %12 : vector<16x256xf32>
    %34 = arith.addf %30, %33 : vector<16x256xf32>
    %35 = vector.extract_strided_slice %1 {offsets = [0, 6], sizes = [16, 1], strides = [1, 1]} : vector<16x9xf32> to vector<16x1xf32>
    %36 = vector.broadcast %35 : vector<16x1xf32> to vector<16x256xf32>
    %37 = arith.mulf %36, %9 : vector<16x256xf32>
    %38 = vector.extract_strided_slice %1 {offsets = [0, 7], sizes = [16, 1], strides = [1, 1]} : vector<16x9xf32> to vector<16x1xf32>
    %39 = vector.broadcast %38 : vector<16x1xf32> to vector<16x256xf32>
    %40 = arith.mulf %39, %0 : vector<16x256xf32>
    %41 = arith.addf %37, %40 : vector<16x256xf32>
    %42 = vector.extract_strided_slice %1 {offsets = [0, 8], sizes = [16, 1], strides = [1, 1]} : vector<16x9xf32> to vector<16x1xf32>
    %43 = vector.broadcast %42 : vector<16x1xf32> to vector<16x256xf32>
    %44 = arith.mulf %43, %12 : vector<16x256xf32>
    %45 = arith.addf %41, %44 : vector<16x256xf32>
    %c16_i32 = arith.constant 16 : i32
    %46 = tpu.dynamic_rotate %23 by %c16_i32 dim 1 : vector<16x256xf32>, i32 -> vector<16x256xf32>
    %47 = vector.broadcast %5 : vector<1x256xf32> to vector<16x256xf32>
    %48 = arith.mulf %46, %47 : vector<16x256xf32>
    %49 = arith.addf %34, %48 : vector<16x256xf32>
    %c240_i32 = arith.constant 240 : i32
    %50 = tpu.dynamic_rotate %45 by %c240_i32 dim 1 : vector<16x256xf32>, i32 -> vector<16x256xf32>
    %51 = vector.broadcast %6 : vector<1x256xf32> to vector<16x256xf32>
    %52 = arith.mulf %50, %51 : vector<16x256xf32>
    %53 = arith.addf %49, %52 : vector<16x256xf32>
    %c0_5 = arith.constant 0 : index
    %c0_6 = arith.constant 0 : index
    %54 = vector.load %arg3[%c0_5, %c0_6] : memref<16x1xf32, #tpu.memory_space<vmem>>, vector<16x1xf32>
    %55 = vector.broadcast %54 : vector<16x1xf32> to vector<16x256xf32>
    %56 = arith.addf %53, %55 : vector<16x256xf32>
    %c0_7 = arith.constant 0 : index
    %c0_8 = arith.constant 0 : index
    %57 = vector.load %arg5[%c0_7, %c0_8] : memref<16x256xf32, #tpu.memory_space<vmem>>, vector<16x256xf32>
    tpu.vector_store %arg5[%c0_7, %c0_8], %56 {strides = array<i32>} : memref<16x256xf32, #tpu.memory_space<vmem>>, vector<16x256xf32>,
    return
  }
  func.func @transform_0(%arg0: i32) -> (i32, i32) {
    %c0_i32 = arith.constant 0 : i32
    %c0_i32_0 = arith.constant 0 : i32
    return %arg0, %c0_i32 : i32, i32
  }
  func.func @transform_1(%arg0: i32) -> (i32, i32) {
    %c0_i32 = arith.constant 0 : i32
    %c0_i32_0 = arith.constant 0 : i32
    return %arg0, %c0_i32 : i32, i32
  }
  func.func @transform_2(%arg0: i32) -> (i32, i32) {
    %c0_i32 = arith.constant 0 : i32
    %c0_i32_0 = arith.constant 0 : i32
    return %arg0, %c0_i32 : i32, i32
  }
  func.func @transform_3(%arg0: i32) -> (i32, i32) {
    %c0_i32 = arith.constant 0 : i32
    %c0_i32_0 = arith.constant 0 : i32
    %c0_i32_1 = arith.constant 0 : i32
    return %c0_i32, %c0_i32_0 : i32, i32
  }
  func.func @transform_4(%arg0: i32) -> (i32, i32) {
    %c0_i32 = arith.constant 0 : i32
    %c0_i32_0 = arith.constant 0 : i32
    return %arg0, %c0_i32 : i32, i32
  }
}

</mosaic_0001>

<llo_original>
// kernel: tpu_custom_call.1
$region0: #{tpu_custom_call.1}
  #allocation0 [shape = 'u32[]', space=smem, size = 0x4, offset = 0x4, fixed_abs, tag = 'smem constant byte address 0x4 - core index']
  #allocation1 [shape = 'u32[144,128]{1,0:T(1,128)}', space=vmem, size = 0x12000, scoped, tag = 'internal scratch']
  %s0 = inlined_call_operand.vmem [shape: f32[64,256], index: 0, kind: input, shape index: {}]
  %s1 = inlined_call_operand.vmem [shape: f32[64,9], index: 1, kind: input, shape index: {}]
  %s2 = inlined_call_operand.vmem [shape: f32[64,1], index: 2, kind: input, shape index: {}]
  %s3 = inlined_call_operand.vmem [shape: f32[8,256], index: 3, kind: input, shape index: {}]
  %s4 = inlined_call_operand.hbm [shape: f32[64,256], index: 4, kind: output, shape index: {}]
  %s5 = sld [smem:[#allocation0]]
  $region49: #{tpu_custom_call.1} parent=0
    _
  %s7 = ssub.s32 1, %s5
  %s8 = scalar_select 0, %s7, %s5
  $region1: #{tpu_custom_call.1} parent=0
    #allocation2 [shape = 'u8[32768]{0}', space=vmem, size = 0x8000, scoped, tag = 'output window, operand 0']
    #allocation3 [shape = 's32[2]{0}', space=sflag, size = 0x8, scoped, tag = 'scoped memory for tpu_custom_call.1']
    %9 = vsyncpa [#allocation3], 0
    %s10 = scalar_lea.sflag [#allocation3], 1
    %11 = vsyncpa %s10, 0
    loop: start=0, step=1, limit=6
    $region2: #{tpu_custom_call.1} parent=1 // loop_pre_header
      _
    $region3: #{tpu_custom_call.1} parent=1 // loop_header
      %s13 = sphi 0, %s17
      %p14 = scmp.ge.s32.totalorder %s13, 6
      %s23 = sphi 0, %s25
      %s26 = sphi 0, %s23
      %s27 = sphi 0, %s26
      %s43 = sphi 0, %s27
      %s49 = sphi 0, %s51
      %s52 = sphi 0, %s49
      %s53 = sphi 0, %s52
      %s69 = sphi 0, %s53
      %s75 = sphi 0, %s77
      %s78 = sphi 0, %s75
      %s79 = sphi 0, %s78
      %s95 = sphi 0, %s79
      %s99 = sphi 0, %s99
      %s101 = sphi 0, %s99
      %s102 = sphi 0, %s101
      %s116 = sphi 0, %s102
      %s122 = sphi 0, %s124
      %s125 = sphi 0, %s122
      %s126 = sphi 0, %s125
      %s142 = sphi 0, %s126
    $region4: #{tpu_custom_call.1} parent=1 // loop_header_branch
      %16 = sbr.rel (%p14) target = $region8
    $region5: #{tpu_custom_call.1} parent=1 // loop_body
      %s18 = ssub.s32 %s13, 1
      %s19 = ssub.s32 %s13, 2
      %s20 = sadd.s32 %s13, 1
      %s21 = ssub.s32 %s13, %s20
      %p22 = scmp.eq.s32.totalorder %s21, 0
      %s24 = sadd.s32 %s23, 1
      %s25 = scalar_select %p22, %s23, %s24
      %p28 = pneg %p22
      %p29 = scmp.eq.s32.totalorder %s13, 3
      %p30 = por %p28, %p29
      %p31 = scmp.ne.s32.totalorder %s23, %s26
      %p32 = scmp.eq.s32.totalorder %s13, 0
      %p33 = por %p31, %p32
      %p34 = scmp.ne.s32.totalorder %s23, %s26
      %p35 = scmp.eq.s32.totalorder %s18, 3
      %p36 = por %p34, %p35
      %p37 = scmp.ne.s32.totalorder %s26, %s27
      %p38 = scmp.eq.s32.totalorder %s18, 0
      %p39 = por %p37, %p38
      %p40 = scmp.ne.s32.totalorder %s26, %s27
      %p41 = scmp.eq.s32.totalorder %s19, 3
      %p42 = por %p40, %p41
      %p44 = scmp.ne.s32.totalorder %s27, %s43
      %p45 = scmp.eq.s32.totalorder %s19, 0
      %p46 = por %p44, %p45
      %s47 = ssub.s32 %s13, %s20
      %p48 = scmp.eq.s32.totalorder %s47, 0
      %s50 = sadd.s32 %s49, 1
      %s51 = scalar_select %p48, %s49, %s50
      %p54 = pneg %p48
      %p55 = scmp.eq.s32.totalorder %s13, 3
      %p56 = por %p54, %p55
      %p57 = scmp.ne.s32.totalorder %s49, %s52
      %p58 = scmp.eq.s32.totalorder %s13, 0
      %p59 = por %p57, %p58
      %p60 = scmp.ne.s32.totalorder %s49, %s52
      %p61 = scmp.eq.s32.totalorder %s18, 3
      %p62 = por %p60, %p61
      %p63 = scmp.ne.s32.totalorder %s52, %s53
      %p64 = scmp.eq.s32.totalorder %s18, 0
      %p65 = por %p63, %p64
      %p66 = scmp.ne.s32.totalorder %s52, %s53
      %p67 = scmp.eq.s32.totalorder %s19, 3
      %p68 = por %p66, %p67
      %p70 = scmp.ne.s32.totalorder %s53, %s69
      %p71 = scmp.eq.s32.totalorder %s19, 0
      %p72 = por %p70, %p71
      %s73 = ssub.s32 %s13, %s20
      %p74 = scmp.eq.s32.totalorder %s73, 0
      %s76 = sadd.s32 %s75, 1
      %s77 = scalar_select %p74, %s75, %s76
      %p80 = pneg %p74
      %p81 = scmp.eq.s32.totalorder %s13, 3
      %p82 = por %p80, %p81
      %p83 = scmp.ne.s32.totalorder %s75, %s78
      %p84 = scmp.eq.s32.totalorder %s13, 0
      %p85 = por %p83, %p84
      %p86 = scmp.ne.s32.totalorder %s75, %s78
      %p87 = scmp.eq.s32.totalorder %s18, 3
      %p88 = por %p86, %p87
      %p89 = scmp.ne.s32.totalorder %s78, %s79
      %p90 = scmp.eq.s32.totalorder %s18, 0
      %p91 = por %p89, %p90
      %p92 = scmp.ne.s32.totalorder %s78, %s79
      %p93 = scmp.eq.s32.totalorder %s19, 3
      %p94 = por %p92, %p93
      %p96 = scmp.ne.s32.totalorder %s79, %s95
      %p97 = scmp.eq.s32.totalorder %s19, 0
      %p98 = por %p96, %p97
      %s100 = sadd.s32 %s99, 1
      %p103 = scmp.eq.s32.totalorder %s13, 3
      %p104 = scmp.ne.s32.totalorder %s99, %s101
      %p105 = scmp.eq.s32.totalorder %s13, 0
      %p106 = por %p104, %p105
      %p107 = scmp.ne.s32.totalorder %s99, %s101
      %p108 = scmp.eq.s32.totalorder %s18, 3
      %p109 = por %p107, %p108
      %p110 = scmp.ne.s32.totalorder %s101, %s102
      %p111 = scmp.eq.s32.totalorder %s18, 0
      %p112 = por %p110, %p111
      %p113 = scmp.ne.s32.totalorder %s101, %s102
      %p114 = scmp.eq.s32.totalorder %s19, 3
      %p115 = por %p113, %p114
      %p117 = scmp.ne.s32.totalorder %s102, %s116
      %p118 = scmp.eq.s32.totalorder %s19, 0
      %p119 = por %p117, %p118
      %s120 = ssub.s32 %s13, %s20
      %p121 = scmp.eq.s32.totalorder %s120, 0
      %s123 = sadd.s32 %s122, 1
      %s124 = scalar_select %p121, %s122, %s123
      %p127 = pneg %p121
      %p128 = scmp.eq.s32.totalorder %s13, 3
      %p129 = por %p127, %p128
      %p130 = scmp.ne.s32.totalorder %s122, %s125
      %p131 = scmp.eq.s32.totalorder %s13, 0
      %p132 = por %p130, %p131
      %p133 = scmp.ne.s32.totalorder %s122, %s125
      %p134 = scmp.eq.s32.totalorder %s18, 3
      %p135 = por %p133, %p134
      %p136 = scmp.ne.s32.totalorder %s125, %s126
      %p137 = scmp.eq.s32.totalorder %s18, 0
      %p138 = por %p136, %p137
      %p139 = scmp.ne.s32.totalorder %s125, %s126
      %p140 = scmp.eq.s32.totalorder %s19, 3
      %p141 = por %p139, %p140
      %p143 = scmp.ne.s32.totalorder %s126, %s142
      %p144 = scmp.eq.s32.totalorder %s19, 0
      %p145 = por %p143, %p144
      %p146 = scmp.le.s32.totalorder 1, %s13
      %p147 = scmp.lt.s32.totalorder %s13, 5
      %p148 = pnand %p146, %p147
      %p149 = pneg %p148
      // Predicated region
      $region9: #{tpu_custom_call.1} parent=5 // pred_check
        _
      $region10: #{tpu_custom_call.1} parent=5 // pred_check_branch
        %151 = sbr.rel (%p148) target = $region12
      $region11: #{tpu_custom_call.1} parent=5 // pred_region
        %s152 = ssub.s32 %s13, 1
        // Predicated region
        $region13: #{tpu_custom_call.1} parent=11 // pred_check
          %p153 = pneg %p112
        $region14: #{tpu_custom_call.1} parent=11 // pred_check_branch
          %155 = sbr.rel (%p153) target = $region16
        $region15: #{tpu_custom_call.1} parent=11 // pred_region
          _
        $region16: #{tpu_custom_call.1} parent=11 // pred_fallthru
          _
      $region12: #{tpu_custom_call.1} parent=5 // pred_fallthru
        _
      %p156 = scmp.lt.s32.totalorder %s13, 4
      // Predicated region
      $region17: #{tpu_custom_call.1} parent=5 // pred_check
        %p157 = pneg %p156
      $region18: #{tpu_custom_call.1} parent=5 // pred_check_branch
        %159 = sbr.rel (%p157) target = $region20
      $region19: #{tpu_custom_call.1} parent=5 // pred_region
        // Predicated region
        $region21: #{tpu_custom_call.1} parent=19 // pred_check
          %p160 = pneg %p33
        $region22: #{tpu_custom_call.1} parent=19 // pred_check_branch
          %162 = sbr.rel (%p160) target = $region24
        $region23: #{tpu_custom_call.1} parent=19 // pred_region
          %s163 = smul.u32 2, %s13
          %p164 = scmp.lt.s32.totalorder %s163, 7
          %s165 = scalar_select %p164, %s163, 7
          %s166 = smul.addr %s165, 2
          %s167 = smul.addr %s166, 8
          %s168 = scalar_lea.vmem %s0, %s167
          %s169 = smul.u32 2, %s13
        $region24: #{tpu_custom_call.1} parent=19 // pred_fallthru
          _
        // Predicated region
        $region25: #{tpu_custom_call.1} parent=19 // pred_check
          %p170 = pneg %p59
        $region26: #{tpu_custom_call.1} parent=19 // pred_check_branch
          %172 = sbr.rel (%p170) target = $region28
        $region27: #{tpu_custom_call.1} parent=19 // pred_region
          %s173 = smul.u32 2, %s13
          %p174 = scmp.lt.s32.totalorder %s173, 7
          %s175 = scalar_select %p174, %s173, 7
          %s176 = smul.addr %s175, 8
          %s177 = scalar_lea.vmem %s1, %s176
          %s178 = smul.u32 2, %s13
        $region28: #{tpu_custom_call.1} parent=19 // pred_fallthru
          _
        // Predicated region
        $region29: #{tpu_custom_call.1} parent=19 // pred_check
          %p179 = pneg %p85
        $region30: #{tpu_custom_call.1} parent=19 // pred_check_branch
          %181 = sbr.rel (%p179) target = $region32
        $region31: #{tpu_custom_call.1} parent=19 // pred_region
          %s182 = smul.u32 2, %s13
          %p183 = scmp.lt.s32.totalorder %s182, 7
          %s184 = scalar_select %p183, %s182, 7
          %s185 = smul.addr %s184, 8
          %s186 = scalar_lea.vmem %s2, %s185
          %s187 = smul.u32 2, %s13
        $region32: #{tpu_custom_call.1} parent=19 // pred_fallthru
          _
      $region20: #{tpu_custom_call.1} parent=5 // pred_fallthru
        _
      %p188 = scmp.le.s32.totalorder 1, %s13
      %p189 = scmp.lt.s32.totalorder %s13, 5
      %p190 = pnand %p188, %p189
      %p191 = pneg %p190
      // Predicated region
      $region33: #{tpu_custom_call.1} parent=5 // pred_check
        _
      $region34: #{tpu_custom_call.1} parent=5 // pred_check_branch
        %193 = sbr.rel (%p190) target = $region36
      $region35: #{tpu_custom_call.1} parent=5 // pred_region
        %s194 = ssub.s32 %s13, 1
        %s195 = smul.u32 2, %s18
        %p196 = scmp.lt.s32.totalorder %s195, 7
        %s197 = scalar_select %p196, %s195, 7
        %s198 = smul.addr %s197, 2
        %s199 = smul.addr %s198, 8
        %s200 = scalar_lea.vmem %s0, %s199
        %p201 = pneg %p39
        %p202 = pneg %p36
        %s203 = smul.u32 2, %s18
        %p204 = scmp.lt.s32.totalorder %s203, 7
        %s205 = scalar_select %p204, %s203, 7
        %s206 = smul.addr %s205, 8
        %s207 = scalar_lea.vmem %s1, %s206
        %p208 = pneg %p65
        %p209 = pneg %p62
        %s210 = smul.u32 2, %s18
        %p211 = scmp.lt.s32.totalorder %s210, 7
        %s212 = scalar_select %p211, %s210, 7
        %s213 = smul.addr %s212, 8
        %s214 = scalar_lea.vmem %s2, %s213
        %p215 = pneg %p91
        %p216 = pneg %p88
        %p217 = pneg %p112
        %p218 = pneg %p109
        %p219 = pneg %p138
        %p220 = pneg %p135
        %s221 = sand.u32 %s125, 1
        %s222 = scalar_lea.sflag [#allocation3], %s221
        %s223 = sand.u32 %s125, 1
        %s224 = smul.addr %s223, 32
        %s225 = scalar_lea.vmem [#allocation2], %s224
        %s226 = smul.u32 2, %s18
        %p227 = scmp.lt.s32.totalorder %s226, 7
        %s228 = scalar_select %p227, %s226, 7
        %s229 = smul.addr %s228, 2
        %s230 = smul.addr %s229, 8
        %s231 = scalar_lea.vmem %s0, %s230
        %s232 = smul.u32 2, %s18
        %s233 = smul.u32 2, %s18
        %p234 = scmp.lt.s32.totalorder %s233, 7
        %s235 = scalar_select %p234, %s233, 7
        %s236 = smul.addr %s235, 8
        %s237 = scalar_lea.vmem %s1, %s236
        %s238 = smul.u32 2, %s18
        %s239 = smul.u32 2, %s18
        %p240 = scmp.lt.s32.totalorder %s239, 7
        %s241 = scalar_select %p240, %s239, 7
        %s242 = smul.addr %s241, 8
        %s243 = scalar_lea.vmem %s2, %s242
        %s244 = smul.u32 2, %s18
        %s245 = smul.u32 2, %s18
        %v246 = vld [vmem:[%s231] sm:$0xff]
        %v247 = vld [vmem:[%s231 + $0x8] sm:$0xff]
        %v248 = vld [vmem:[%s231 + $0x10] sm:$0xff]
        %v249 = vld [vmem:[%s231 + $0x18] sm:$0xff]
        %v250 = vld [vmem:[%s237] sm:$0xff]
        %v251 = vld [vmem:[%s237 + $0x8] sm:$0xff]
        %v252 = vld [vmem:[%s3] sm:$0xff]
        %v253 = vld [vmem:[%s3 + $0x8] sm:$0xff]
        %254 = vrot.lane.b32.xlu0 %v246, 1
        %v255 = vpop.permute.xlu0 %254
        %256 = vrot.lane.b32.xlu0 %v248, 1
        %v257 = vpop.permute.xlu0 %256
        %258 = vrot.lane.b32.xlu0 %v247, 1
        %v259 = vpop.permute.xlu0 %258
        %260 = vrot.lane.b32.xlu0 %v249, 1
        %v261 = vpop.permute.xlu0 %260
        %v262 = vlaneseq
        %v263 = vand.u32 %v262, 127
        %vm264 = vcmp.lt.s32.totalorder %v263, 1
        %v265 = vsel %vm264, %v255, %v259
        %v266 = vsel %vm264, %v257, %v261
        %v267 = vsel %vm264, %v259, %v255
        %v268 = vsel %vm264, %v261, %v257
        %v269 = vlaneseq
        %v270 = vshrl.u32 %v269, 7
        %v271 = vsub.s32 0, %v270
        %v272 = vrot.slane %v252, %v271
        %v273 = vlaneseq
        %v274 = vshrl.u32 %v273, 7
        %v275 = vsub.s32 0, %v274
        %v276 = vrot.slane %v253, %v275
        %v277 = vmul.f32 %v267, %v272
        %v278 = vmul.f32 %v265, %v276
        %v279 = vmul.f32 %v268, %v272
        %v280 = vmul.f32 %v266, %v276
        %281 = vrot.lane.b32.xlu0 %v246, 127
        %v282 = vpop.permute.xlu0 %281
        %283 = vrot.lane.b32.xlu0 %v248, 127
        %v284 = vpop.permute.xlu0 %283
        %285 = vrot.lane.b32.xlu0 %v247, 127
        %v286 = vpop.permute.xlu0 %285
        %287 = vrot.lane.b32.xlu0 %v249, 127
        %v288 = vpop.permute.xlu0 %287
        %vm289 = vcmp.lt.s32.totalorder %v263, 127
        %v290 = vsel %vm289, %v282, %v286
        %v291 = vsel %vm289, %v284, %v288
        %v292 = vsel %vm289, %v286, %v282
        %v293 = vsel %vm289, %v288, %v284
        %v294 = vlaneseq
        %v295 = vshrl.u32 %v294, 7
        %v296 = vsub.s32 1, %v295
        %v297 = vrot.slane %v252, %v296
        %v298 = vlaneseq
        %v299 = vshrl.u32 %v298, 7
        %v300 = vsub.s32 1, %v299
        %v301 = vrot.slane %v253, %v300
        %v302 = vmul.f32 %v290, %v297
        %v303 = vmul.f32 %v292, %v301
        %v304 = vmul.f32 %v291, %v297
        %v305 = vmul.f32 %v293, %v301
        %307 = vset.pattern.permute.xlu0 0
        %308 = vperm.xlu0 %307, %v250
        %v309 = vpop.permute.xlu0 %308
        %312 = vset.pattern.permute.xlu0 0
        %313 = vperm.xlu0 %312, %v251
        %v314 = vpop.permute.xlu0 %313
        %v316 = vmul.f32 %v309, %v277
        %v317 = vmul.f32 %v309, %v278
        %v318 = vmul.f32 %v314, %v279
        %v319 = vmul.f32 %v314, %v280
        %320 = vset.pattern.permute.xlu0 1
        %321 = vperm.xlu0 %320, %v250
        %v322 = vpop.permute.xlu0 %321
        %324 = vset.pattern.permute.xlu0 1
        %325 = vperm.xlu0 %324, %v251
        %v326 = vpop.permute.xlu0 %325
        %v328 = vmul.f32 %v322, %v246
        %v329 = vmul.f32 %v322, %v247
        %v330 = vmul.f32 %v326, %v248
        %v331 = vmul.f32 %v326, %v249
        %v332 = vadd.f32 %v316, %v328
        %v333 = vadd.f32 %v317, %v329
        %v334 = vadd.f32 %v318, %v330
        %v335 = vadd.f32 %v319, %v331
        %336 = vset.pattern.permute.xlu0 2
        %337 = vperm.xlu0 %336, %v250
        %v338 = vpop.permute.xlu0 %337
        %340 = vset.pattern.permute.xlu0 2
        %341 = vperm.xlu0 %340, %v251
        %v342 = vpop.permute.xlu0 %341
        %v344 = vmul.f32 %v338, %v302
        %v345 = vmul.f32 %v338, %v303
        %v346 = vmul.f32 %v342, %v304
        %v347 = vmul.f32 %v342, %v305
        %v348 = vadd.f32 %v332, %v344
        %v349 = vadd.f32 %v333, %v345
        %v350 = vadd.f32 %v334, %v346
        %v351 = vadd.f32 %v335, %v347
        %352 = vset.pattern.permute.xlu0 3
        %353 = vperm.xlu0 %352, %v250
        %v354 = vpop.permute.xlu0 %353
        %356 = vset.pattern.permute.xlu0 3
        %357 = vperm.xlu0 %356, %v251
        %v358 = vpop.permute.xlu0 %357
        %v360 = vmul.f32 %v354, %v277
        %v361 = vmul.f32 %v354, %v278
        %v362 = vmul.f32 %v358, %v279
        %v363 = vmul.f32 %v358, %v280
        %364 = vset.pattern.permute.xlu0 4
        %365 = vperm.xlu0 %364, %v250
        %v366 = vpop.permute.xlu0 %365
        %368 = vset.pattern.permute.xlu0 4
        %369 = vperm.xlu0 %368, %v251
        %v370 = vpop.permute.xlu0 %369
        %v372 = vmul.f32 %v366, %v246
        %v373 = vmul.f32 %v366, %v247
        %v374 = vmul.f32 %v370, %v248
        %v375 = vmul.f32 %v370, %v249
        %v376 = vadd.f32 %v360, %v372
        %v377 = vadd.f32 %v361, %v373
        %v378 = vadd.f32 %v362, %v374
        %v379 = vadd.f32 %v363, %v375
        %380 = vset.pattern.permute.xlu0 5
        %381 = vperm.xlu0 %380, %v250
        %v382 = vpop.permute.xlu0 %381
        %384 = vset.pattern.permute.xlu0 5
        %385 = vperm.xlu0 %384, %v251
        %v386 = vpop.permute.xlu0 %385
        %v388 = vmul.f32 %v382, %v302
        %v389 = vmul.f32 %v382, %v303
        %v390 = vmul.f32 %v386, %v304
        %v391 = vmul.f32 %v386, %v305
        %v392 = vadd.f32 %v376, %v388
        %v393 = vadd.f32 %v377, %v389
        %v394 = vadd.f32 %v378, %v390
        %v395 = vadd.f32 %v379, %v391
        %396 = vset.pattern.permute.xlu0 6
        %397 = vperm.xlu0 %396, %v250
        %v398 = vpop.permute.xlu0 %397
        %400 = vset.pattern.permute.xlu0 6
        %401 = vperm.xlu0 %400, %v251
        %v402 = vpop.permute.xlu0 %401
        %v404 = vmul.f32 %v398, %v277
        %v405 = vmul.f32 %v398, %v278
        %v406 = vmul.f32 %v402, %v279
        %v407 = vmul.f32 %v402, %v280
        %408 = vset.pattern.permute.xlu0 7
        %409 = vperm.xlu0 %408, %v250
        %v410 = vpop.permute.xlu0 %409
        %412 = vset.pattern.permute.xlu0 7
        %413 = vperm.xlu0 %412, %v251
        %v414 = vpop.permute.xlu0 %413
        %v416 = vmul.f32 %v410, %v246
        %v417 = vmul.f32 %v410, %v247
        %v418 = vmul.f32 %v414, %v248
        %v419 = vmul.f32 %v414, %v249
        %v420 = vadd.f32 %v404, %v416
        %v421 = vadd.f32 %v405, %v417
        %v422 = vadd.f32 %v406, %v418
        %v423 = vadd.f32 %v407, %v419
        %424 = vset.pattern.permute.xlu0 8
        %425 = vperm.xlu0 %424, %v250
        %v426 = vpop.permute.xlu0 %425
        %428 = vset.pattern.permute.xlu0 8
        %429 = vperm.xlu0 %428, %v251
        %v430 = vpop.permute.xlu0 %429
        %v432 = vmul.f32 %v426, %v302
        %v433 = vmul.f32 %v426, %v303
        %v434 = vmul.f32 %v430, %v304
        %v435 = vmul.f32 %v430, %v305
        %v436 = vadd.f32 %v420, %v432
        %v437 = vadd.f32 %v421, %v433
        %v438 = vadd.f32 %v422, %v434
        %v439 = vadd.f32 %v423, %v435
        %440 = vrot.lane.b32.xlu0 %v348, 16
        %v441 = vpop.permute.xlu0 %440
        %442 = vrot.lane.b32.xlu0 %v350, 16
        %v443 = vpop.permute.xlu0 %442
        %444 = vrot.lane.b32.xlu0 %v349, 16
        %v445 = vpop.permute.xlu0 %444
        %446 = vrot.lane.b32.xlu0 %v351, 16
        %v447 = vpop.permute.xlu0 %446
        %vm448 = vcmp.lt.s32.totalorder %v263, 16
        %v449 = vsel %vm448, %v441, %v445
        %v450 = vsel %vm448, %v443, %v447
        %v451 = vsel %vm448, %v445, %v441
        %v452 = vsel %vm448, %v447, %v443
        %v453 = vlaneseq
        %v454 = vshrl.u32 %v453, 7
        %v455 = vsub.s32 2, %v454
        %v456 = vrot.slane %v252, %v455
        %v457 = vlaneseq
        %v458 = vshrl.u32 %v457, 7
        %v459 = vsub.s32 2, %v458
        %v460 = vrot.slane %v253, %v459
        %v461 = vmul.f32 %v451, %v456
        %v462 = vmul.f32 %v449, %v460
        %v463 = vmul.f32 %v452, %v456
        %v464 = vmul.f32 %v450, %v460
        %v465 = vadd.f32 %v392, %v461
        %v466 = vadd.f32 %v393, %v462
        %v467 = vadd.f32 %v394, %v463
        %v468 = vadd.f32 %v395, %v464
        %469 = vrot.lane.b32.xlu0 %v436, 112
        %v470 = vpop.permute.xlu0 %469
        %471 = vrot.lane.b32.xlu0 %v438, 112
        %v472 = vpop.permute.xlu0 %471
        %473 = vrot.lane.b32.xlu0 %v437, 112
        %v474 = vpop.permute.xlu0 %473
        %475 = vrot.lane.b32.xlu0 %v439, 112
        %v476 = vpop.permute.xlu0 %475
        %vm477 = vcmp.lt.s32.totalorder %v263, 112
        %v478 = vsel %vm477, %v470, %v474
        %v479 = vsel %vm477, %v472, %v476
        %v480 = vsel %vm477, %v474, %v470
        %v481 = vsel %vm477, %v476, %v472
        %v482 = vlaneseq
        %v483 = vshrl.u32 %v482, 7
        %v484 = vsub.s32 3, %v483
        %v485 = vrot.slane %v252, %v484
        %v486 = vlaneseq
        %v487 = vshrl.u32 %v486, 7
        %v488 = vsub.s32 3, %v487
        %v489 = vrot.slane %v253, %v488
        %v490 = vmul.f32 %v478, %v485
        %v491 = vmul.f32 %v480, %v489
        %v492 = vmul.f32 %v479, %v485
        %v493 = vmul.f32 %v481, %v489
        %v494 = vadd.f32 %v465, %v490
        %v495 = vadd.f32 %v466, %v491
        %v496 = vadd.f32 %v467, %v492
        %v497 = vadd.f32 %v468, %v493
        %v498 = vld [vmem:[%s243] sm:$0xff]
        %v499 = vld [vmem:[%s243 + $0x8] sm:$0xff]
        %501 = vset.pattern.permute.xlu0 0
        %502 = vperm.xlu0 %501, %v498
        %v503 = vpop.permute.xlu0 %502
        %506 = vset.pattern.permute.xlu0 0
        %507 = vperm.xlu0 %506, %v499
        %v508 = vpop.permute.xlu0 %507
        %v510 = vadd.f32 %v494, %v503
        %v511 = vadd.f32 %v495, %v503
        %v512 = vadd.f32 %v496, %v508
        %v513 = vadd.f32 %v497, %v508
        %514 = vst [vmem:[%s225] sm:$0xff] %v510
        %515 = vst [vmem:[%s225 + $0x8] sm:$0xff] %v511
        %516 = vst [vmem:[%s225 + $0x10] sm:$0xff] %v512
        %517 = vst [vmem:[%s225 + $0x18] sm:$0xff] %v513
        %s518 = sand.u32 %s125, 1
        %s519 = scalar_lea.sflag [#allocation3], %s518
        %s520 = sand.u32 %s125, 1
        %s521 = smul.addr %s520, 32
        %s522 = scalar_lea.vmem [#allocation2], %s521
        // Predicated region
        $region37: #{tpu_custom_call.1} parent=35 // pred_check
          %p523 = pneg %p135
        $region38: #{tpu_custom_call.1} parent=35 // pred_check_branch
          %525 = sbr.rel (%p523) target = $region40
        $region39: #{tpu_custom_call.1} parent=35 // pred_region
          %s526 = smul.u32 2, %s18
          %s528 = ssub.s32 512, 512
          %529 = vsyncadd %s519, %s528
          %s530 = smul.addr %s526, 2
          %s531 = smul.addr %s530, 128
          %s532 = scalar_lea.hbm %s4, %s531
          %s533 = sshll.u32 %s522, 4
          %s534 = int_to_ptr.vmem [resolvable:$true] %s533
          %539 = dma.vmem_to_hbm [thread:$0]  %s534, 512, %s532, %s519, 256, 256, 16
        $region40: #{tpu_custom_call.1} parent=35 // pred_fallthru
          _
      $region36: #{tpu_custom_call.1} parent=5 // pred_fallthru
        _
      %p540 = scmp.le.s32.totalorder 2, %s13
      // Predicated region
      $region41: #{tpu_custom_call.1} parent=5 // pred_check
        %p541 = pneg %p540
      $region42: #{tpu_custom_call.1} parent=5 // pred_check_branch
        %543 = sbr.rel (%p541) target = $region44
      $region43: #{tpu_custom_call.1} parent=5 // pred_region
        %s544 = ssub.s32 %s13, 2
        // Predicated region
        $region45: #{tpu_custom_call.1} parent=43 // pred_check
          %p545 = pneg %p141
        $region46: #{tpu_custom_call.1} parent=43 // pred_check_branch
          %547 = sbr.rel (%p545) target = $region48
        $region47: #{tpu_custom_call.1} parent=43 // pred_region
          %s548 = sand.u32 %s126, 1
          %s549 = scalar_lea.sflag [#allocation3], %s548
          %s550 = sand.u32 %s126, 1
          %s551 = smul.addr %s550, 32
          %s552 = scalar_lea.vmem [#allocation2], %s551
          %553 = dma.done %s549, 512
        $region48: #{tpu_custom_call.1} parent=43 // pred_fallthru
          _
      $region44: #{tpu_custom_call.1} parent=5 // pred_fallthru
        _
    $region6: #{tpu_custom_call.1} parent=1 // loop_footer
      %s17 = sadd.s32 1, %s13
    $region7: #{tpu_custom_call.1} parent=1 // loop_footer_branch
      %12 = sbr.rel target = $region3
    $region8: #{tpu_custom_call.1} parent=1 // loop_exit
      _
    %554 = vsyncpa [#allocation3], 1
    %s555 = scalar_lea.sflag [#allocation3], 1
    %556 = vsyncpa %s555, 1

</llo_original>
